<compile_context>
chip_gen: v7x
topology: tpu7x:2x2x1
jax: 0.10.0
libtpu: 0.0.40
codegen_flags: <defaults>
</compile_context>

<pallas_src>
import jax
import jax.numpy as jnp
from jax.experimental import pallas as pl
from jax.experimental.pallas import tpu as pltpu

# ---------------- config (small synthetic shapes) ----------------
B = 64        # tokens (batch)
D = 32        # in_features == out_features (required by results = zeros_like(inputs))
E = 4         # num_experts
TOP_K = 2     # num_experts_per_tok


def moe_kernel(x_ref, gw_ref, ew_ref, eb_ref, o_ref):
    """Grid: (B // TB,).  One grid step handles a full token tile for ALL experts.

    x_ref  : (TB, D)    token tile, f32
    gw_ref : (D, E)     gate weight, f32
    ew_ref : (E, D, D)  expert weights, bf16
    eb_ref : (E, D)     expert biases, f32
    o_ref  : (TB, D)    output tile
    """
    x = x_ref[...]                                                   # (TB, D) f32

    # ---- gate + iterative top-K + softmax -> dense routing weights (TB, E) ----
    # Kept in f32 so the selected experts match the f32 reference exactly.
    logits = jnp.dot(x, gw_ref[...], preferred_element_type=jnp.float32)   # (TB, E)
    tb, ne = logits.shape
    iota = jax.lax.broadcasted_iota(jnp.int32, (tb, ne), 1)

    remaining = logits
    wd = jnp.zeros_like(logits)
    denom = jnp.zeros((tb, 1), jnp.float32)
    maxtop = None
    # static top-K loop (K is a Python int); first-occurrence tie-breaking (== lax.top_k)
    for k in range(TOP_K):
        m = jnp.max(remaining, axis=-1, keepdims=True)               # (TB, 1)
        cand = jnp.where(remaining == m, iota, ne)
        idx = jnp.min(cand, axis=-1, keepdims=True)
        sel = iota == idx                                            # (TB, E) one-hot
        if k == 0:
            maxtop = m                                               # max of the top-K set
        val = jnp.exp(m - maxtop)                                    # (TB, 1)
        wd = wd + jnp.where(sel, val, 0.0)
        denom = denom + val
        remaining = jnp.where(sel, -jnp.inf, remaining)
    wd = wd / denom                                                  # softmax over selected K

    # ---- per-expert MXU dot + VPU weighted accumulate (no expand/reduce matmuls) ----
    x_bf = x.astype(jnp.bfloat16)                                    # bf16 operands for the MXU
    acc = jnp.zeros((tb, x.shape[1]), jnp.float32)
    for e in range(ne):                                              # static unroll (E is small)
        y_e = jnp.dot(x_bf, ew_ref[e],
                      preferred_element_type=jnp.float32)            # (TB, D) f32 accumulate
        y_e = y_e + eb_ref[pl.ds(e, 1), :]                           # (1, D) bias broadcast
        acc = acc + wd[:, e:e + 1] * y_e                             # routed weight on the VPU
    o_ref[...] = acc.astype(o_ref.dtype)


def moe_forward(x, gate_w, expert_w, expert_b, *, tb=None):
    """x: (B, D) f32; gate_w: (D, E); expert_w: (E, D_in, D_out); expert_b: (E, D)."""
    Bx, Dx = x.shape
    Ex, Din, Dout = expert_w.shape
    assert Din == Dx and Dout == Dx, "MoE upcycled from Linear(D, D)"

    if tb is None:
        # One token tile per TensorCore: 1 grid step on single-TC chips (v5e/v6e),
        # 2 "parallel" tiles when the device reports more than one core (v7x).
        try:
            cores = int(getattr(jax.devices()[0], "num_cores", 1) or 1)
        except Exception:
            cores = 1
        n_tiles = 2 if (cores > 1 and Bx % 2 == 0) else 1
        tb = Bx // n_tiles
    assert Bx % tb == 0, "batch must be divisible by the token tile"

    # Dominant bytes (E*D*D) go over HBM->VMEM as bf16; MXU consumes bf16 directly.
    ew_bf16 = expert_w.astype(jnp.bfloat16)

    cost = pl.CostEstimate(
        flops=2 * Bx * Dx * Dx * Ex + 2 * Bx * Dx * Ex + 3 * Bx * Dx * Ex,
        transcendentals=Bx * TOP_K,
        bytes_accessed=(x.size * 4 + gate_w.size * 4 + ew_bf16.size * 2
                        + expert_b.size * 4 + Bx * Dx * 4),
    )

    return pl.pallas_call(
        moe_kernel,
        out_shape=jax.ShapeDtypeStruct((Bx, Dx), x.dtype),
        grid_spec=pltpu.PrefetchScalarGridSpec(
            num_scalar_prefetch=0,
            grid=(Bx // tb,),
            in_specs=[
                pl.BlockSpec((tb, Dx), lambda i: (i, 0)),            # x tile
                pl.BlockSpec((Dx, Ex), lambda i: (0, 0)),            # gate weight (full, f32)
                pl.BlockSpec((Ex, Dx, Dx), lambda i: (0, 0, 0)),     # expert weights (full, bf16)
                pl.BlockSpec((Ex, Dx), lambda i: (0, 0)),            # expert biases (full, f32)
            ],
            out_specs=pl.BlockSpec((tb, Dx), lambda i: (i, 0)),
        ),
        compiler_params=pltpu.CompilerParams(
            dimension_semantics=("parallel",)),
        cost_estimate=cost,
    )(x, gate_w, ew_bf16, expert_b)


def moe_reference(x, gate_w, expert_w, expert_b, k):
    """Pure-JAX f32 reference mirroring the PyTorch forward (minus the debug print/exit)."""
    logits = x @ gate_w                                              # (B, E)
    topv, topi = jax.lax.top_k(logits, k)                            # (B, K)
    w = jax.nn.softmax(topv.astype(jnp.float32), axis=1).astype(x.dtype)
    y = jnp.einsum('bd,edo->beo', x, expert_w) + expert_b[None]      # (B, E, D)
    mask = jax.nn.one_hot(topi, expert_w.shape[0], dtype=x.dtype)    # (B, K, E)
    wdense = jnp.einsum('bk,bke->be', w, mask)                       # (B, E)
    return jnp.einsum('be,bed->bd', wdense, y)


if __name__ == "__main__":
    key = jax.random.PRNGKey(0)
    kx, kg, kw, kb = jax.random.split(key, 4)

    x = jax.random.normal(kx, (B, D), dtype=jnp.float32)
    # gate: nn.Linear(D, E, bias=False) -> stored transposed (D, E)
    gate_w = jax.random.normal(kg, (D, E), dtype=jnp.float32) * (1.0 / D ** 0.5)
    # experts: E x nn.Linear(D, D) -> stored transposed (E, D_in, D_out) + bias (E, D)
    expert_w = jax.random.normal(kw, (E, D, D), dtype=jnp.float32) * (1.0 / D ** 0.5)
    expert_b = jax.random.normal(kb, (E, D), dtype=jnp.float32) * 0.01

    out = moe_forward(x, gate_w, expert_w, expert_b)
    out = jax.block_until_ready(out)

    ref = moe_reference(x, gate_w, expert_w, expert_b, TOP_K)
    # Expert matmuls use bf16 operands (f32 accumulate); routing is exact f32 ->
    # tolerance loosened accordingly.
    assert jnp.allclose(out, ref, atol=5e-2, rtol=5e-2), "Pallas MoE mismatch vs reference"

    print("KERNEL_OK")
</pallas_src>

<mosaic_0001>
module attributes {stable_mosaic.version = 11 : i64} {
  func.func @moe_kernel(%arg0: i32, %arg1: memref<64x32xf32, #tpu.memory_space<vmem>>, %arg2: memref<32x4xf32, #tpu.memory_space<vmem>>, %arg3: memref<4x32x32xbf16, #tpu.memory_space<vmem>>, %arg4: memref<4x32xf32, #tpu.memory_space<vmem>>, %arg5: memref<64x32xf32, #tpu.memory_space<vmem>>) attributes {dimension_semantics = [#tpu.dimension_semantics<parallel>], iteration_bounds = array<i64: 1>, scalar_prefetch = 0 : i64, scratch_operands = 0 : i64, tpu.core_type = #tpu.core_type<tc>, window_params = [{transform_indices = @transform_0, window_bounds = array<i64: 64, 32>}, {pipeline_mode = #tpu.pipeline_mode<synchronous>, transform_indices = @transform_1, window_bounds = array<i64: 32, 4>}, {pipeline_mode = #tpu.pipeline_mode<synchronous>, transform_indices = @transform_2, window_bounds = array<i64: 4, 32, 32>}, {pipeline_mode = #tpu.pipeline_mode<synchronous>, transform_indices = @transform_3, window_bounds = array<i64: 4, 32>}, {transform_indices = @transform_4, window_bounds = array<i64: 64, 32>}]} {
    %c0 = arith.constant 0 : index
    %c0_0 = arith.constant 0 : index
    %0 = vector.load %arg1[%c0, %c0_0] : memref<64x32xf32, #tpu.memory_space<vmem>>, vector<64x32xf32>
    %c0_1 = arith.constant 0 : index
    %c0_2 = arith.constant 0 : index
    %1 = vector.load %arg2[%c0_1, %c0_2] : memref<32x4xf32, #tpu.memory_space<vmem>>, vector<32x4xf32>
    %cst = arith.constant dense<0.000000e+00> : vector<64x4xf32>
    %2 = tpu.matmul %0, %1, %cst {dimension_numbers = #tpu.dot_dimension_numbers<[1], [0], [0], [1], [0, 0, 1, 1], [], []>} : vector<64x32xf32>, vector<32x4xf32>, vector<64x4xf32> -> vector<64x4xf32>
    %3 = tpu.iota {dimensions = array<i32: 1>} : vector<64x4xi32>
    %cst_3 = arith.constant 0.000000e+00 : f32
    %4 = vector.broadcast %cst_3 : f32 to vector<64x4xf32>
    %cst_4 = arith.constant 0.000000e+00 : f32
    %5 = vector.broadcast %cst_4 : f32 to vector<64x1xf32>
    %cst_5 = arith.constant dense<0xFF800000> : vector<64xf32>
    %6 = vector.multi_reduction <maximumf>, %2, %cst_5 [1] : vector<64x4xf32> to vector<64xf32>
    %7 = vector.shape_cast %6 : vector<64xf32> to vector<64x1xf32>
    %8 = vector.broadcast %7 : vector<64x1xf32> to vector<64x4xf32>
    %9 = arith.cmpf oeq, %2, %8 : vector<64x4xf32>
    %c4_i32 = arith.constant 4 : i32
    %10 = vector.broadcast %c4_i32 : i32 to vector<64x4xi32>
    %11 = arith.select %9, %3, %10 : vector<64x4xi1>, vector<64x4xi32>
    %cst_6 = arith.constant dense<2147483647> : vector<64xi32>
    %12 = vector.multi_reduction <minsi>, %11, %cst_6 [1] : vector<64x4xi32> to vector<64xi32>
    %13 = vector.shape_cast %12 : vector<64xi32> to vector<64x1xi32>
    %14 = vector.broadcast %13 : vector<64x1xi32> to vector<64x4xi32>
    %15 = arith.cmpi eq, %3, %14 : vector<64x4xi32>
    %16 = arith.subf %7, %7 : vector<64x1xf32>
    %17 = math.exp %16 : vector<64x1xf32>
    %cst_7 = arith.constant 0.000000e+00 : f32
    %18 = vector.shape_cast %17 : vector<64x1xf32> to vector<64x1xf32>
    %19 = vector.broadcast %18 : vector<64x1xf32> to vector<64x4xf32>
    %20 = vector.broadcast %cst_7 : f32 to vector<64x4xf32>
    %21 = arith.select %15, %19, %20 : vector<64x4xi1>, vector<64x4xf32>
    %22 = arith.addf %4, %21 : vector<64x4xf32>
    %23 = arith.addf %5, %17 : vector<64x1xf32>
    %cst_8 = arith.constant 0xFF800000 : f32
    %24 = vector.broadcast %cst_8 : f32 to vector<64x4xf32>
    %25 = arith.select %15, %24, %2 : vector<64x4xi1>, vector<64x4xf32>
    %cst_9 = arith.constant dense<0xFF800000> : vector<64xf32>
    %26 = vector.multi_reduction <maximumf>, %25, %cst_9 [1] : vector<64x4xf32> to vector<64xf32>
    %27 = vector.shape_cast %26 : vector<64xf32> to vector<64x1xf32>
    %28 = vector.broadcast %27 : vector<64x1xf32> to vector<64x4xf32>
    %29 = arith.cmpf oeq, %25, %28 : vector<64x4xf32>
    %c4_i32_10 = arith.constant 4 : i32
    %30 = vector.broadcast %c4_i32_10 : i32 to vector<64x4xi32>
    %31 = arith.select %29, %3, %30 : vector<64x4xi1>, vector<64x4xi32>
    %cst_11 = arith.constant dense<2147483647> : vector<64xi32>
    %32 = vector.multi_reduction <minsi>, %31, %cst_11 [1] : vector<64x4xi32> to vector<64xi32>
    %33 = vector.shape_cast %32 : vector<64xi32> to vector<64x1xi32>
    %34 = vector.broadcast %33 : vector<64x1xi32> to vector<64x4xi32>
    %35 = arith.cmpi eq, %3, %34 : vector<64x4xi32>
    %36 = arith.subf %27, %7 : vector<64x1xf32>
    %37 = math.exp %36 : vector<64x1xf32>
    %cst_12 = arith.constant 0.000000e+00 : f32
    %38 = vector.shape_cast %37 : vector<64x1xf32> to vector<64x1xf32>
    %39 = vector.broadcast %38 : vector<64x1xf32> to vector<64x4xf32>
    %40 = vector.broadcast %cst_12 : f32 to vector<64x4xf32>
    %41 = arith.select %35, %39, %40 : vector<64x4xi1>, vector<64x4xf32>
    %42 = arith.addf %22, %41 : vector<64x4xf32>
    %43 = arith.addf %23, %37 : vector<64x1xf32>
    %44 = vector.broadcast %43 : vector<64x1xf32> to vector<64x4xf32>
    %45 = arith.divf %42, %44 : vector<64x4xf32>
    %46 = arith.truncf %0 : vector<64x32xf32> to vector<64x32xbf16>
    %cst_13 = arith.constant 0.000000e+00 : f32
    %47 = vector.broadcast %cst_13 : f32 to vector<64x32xf32>
    %c0_14 = arith.constant 0 : index
    %c0_15 = arith.constant 0 : index
    %c0_16 = arith.constant 0 : index
    %48 = vector.load %arg3[%c0_14, %c0_15, %c0_16] : memref<4x32x32xbf16, #tpu.memory_space<vmem>>, vector<1x32x32xbf16>
    %49 = vector.shape_cast %48 : vector<1x32x32xbf16> to vector<32x32xbf16>
    %cst_17 = arith.constant dense<0.000000e+00> : vector<64x32xf32>
    %50 = tpu.matmul %46, %49, %cst_17 {dimension_numbers = #tpu.dot_dimension_numbers<[1], [0], [0], [1], [0, 0, 1, 1], [], []>} : vector<64x32xbf16>, vector<32x32xbf16>, vector<64x32xf32> -> vector<64x32xf32>
    %c0_18 = arith.constant 0 : index
    %c0_19 = arith.constant 0 : index
    %51 = vector.load %arg4[%c0_18, %c0_19] : memref<4x32xf32, #tpu.memory_space<vmem>>, vector<1x32xf32>
    %52 = vector.broadcast %51 : vector<1x32xf32> to vector<64x32xf32>
    %53 = arith.addf %50, %52 : vector<64x32xf32>
    %54 = vector.extract_strided_slice %45 {offsets = [0, 0], sizes = [64, 1], strides = [1, 1]} : vector<64x4xf32> to vector<64x1xf32>
    %55 = vector.broadcast %54 : vector<64x1xf32> to vector<64x32xf32>
    %56 = arith.mulf %55, %53 : vector<64x32xf32>
    %57 = arith.addf %47, %56 : vector<64x32xf32>
    %c1 = arith.constant 1 : index
    %c0_20 = arith.constant 0 : index
    %c0_21 = arith.constant 0 : index
    %58 = vector.load %arg3[%c1, %c0_20, %c0_21] : memref<4x32x32xbf16, #tpu.memory_space<vmem>>, vector<1x32x32xbf16>
    %59 = vector.shape_cast %58 : vector<1x32x32xbf16> to vector<32x32xbf16>
    %cst_22 = arith.constant dense<0.000000e+00> : vector<64x32xf32>
    %60 = tpu.matmul %46, %59, %cst_22 {dimension_numbers = #tpu.dot_dimension_numbers<[1], [0], [0], [1], [0, 0, 1, 1], [], []>} : vector<64x32xbf16>, vector<32x32xbf16>, vector<64x32xf32> -> vector<64x32xf32>
    %c1_23 = arith.constant 1 : index
    %c0_24 = arith.constant 0 : index
    %61 = vector.load %arg4[%c1_23, %c0_24] : memref<4x32xf32, #tpu.memory_space<vmem>>, vector<1x32xf32>
    %62 = vector.broadcast %61 : vector<1x32xf32> to vector<64x32xf32>
    %63 = arith.addf %60, %62 : vector<64x32xf32>
    %64 = vector.extract_strided_slice %45 {offsets = [0, 1], sizes = [64, 1], strides = [1, 1]} : vector<64x4xf32> to vector<64x1xf32>
    %65 = vector.broadcast %64 : vector<64x1xf32> to vector<64x32xf32>
    %66 = arith.mulf %65, %63 : vector<64x32xf32>
    %67 = arith.addf %57, %66 : vector<64x32xf32>
    %c2 = arith.constant 2 : index
    %c0_25 = arith.constant 0 : index
    %c0_26 = arith.constant 0 : index
    %68 = vector.load %arg3[%c2, %c0_25, %c0_26] : memref<4x32x32xbf16, #tpu.memory_space<vmem>>, vector<1x32x32xbf16>
    %69 = vector.shape_cast %68 : vector<1x32x32xbf16> to vector<32x32xbf16>
    %cst_27 = arith.constant dense<0.000000e+00> : vector<64x32xf32>
    %70 = tpu.matmul %46, %69, %cst_27 {dimension_numbers = #tpu.dot_dimension_numbers<[1], [0], [0], [1], [0, 0, 1, 1], [], []>} : vector<64x32xbf16>, vector<32x32xbf16>, vector<64x32xf32> -> vector<64x32xf32>
    %c2_28 = arith.constant 2 : index
    %c0_29 = arith.constant 0 : index
    %71 = vector.load %arg4[%c2_28, %c0_29] : memref<4x32xf32, #tpu.memory_space<vmem>>, vector<1x32xf32>
    %72 = vector.broadcast %71 : vector<1x32xf32> to vector<64x32xf32>
    %73 = arith.addf %70, %72 : vector<64x32xf32>
    %74 = vector.extract_strided_slice %45 {offsets = [0, 2], sizes = [64, 1], strides = [1, 1]} : vector<64x4xf32> to vector<64x1xf32>
    %75 = vector.broadcast %74 : vector<64x1xf32> to vector<64x32xf32>
    %76 = arith.mulf %75, %73 : vector<64x32xf32>
    %77 = arith.addf %67, %76 : vector<64x32xf32>
    %c3 = arith.constant 3 : index
    %c0_30 = arith.constant 0 : index
    %c0_31 = arith.constant 0 : index
    %78 = vector.load %arg3[%c3, %c0_30, %c0_31] : memref<4x32x32xbf16, #tpu.memory_space<vmem>>, vector<1x32x32xbf16>
    %79 = vector.shape_cast %78 : vector<1x32x32xbf16> to vector<32x32xbf16>
    %cst_32 = arith.constant dense<0.000000e+00> : vector<64x32xf32>
    %80 = tpu.matmul %46, %79, %cst_32 {dimension_numbers = #tpu.dot_dimension_numbers<[1], [0], [0], [1], [0, 0, 1, 1], [], []>} : vector<64x32xbf16>, vector<32x32xbf16>, vector<64x32xf32> -> vector<64x32xf32>
    %c3_33 = arith.constant 3 : index
    %c0_34 = arith.constant 0 : index
    %81 = vector.load %arg4[%c3_33, %c0_34] : memref<4x32xf32, #tpu.memory_space<vmem>>, vector<1x32xf32>
    %82 = vector.broadcast %81 : vector<1x32xf32> to vector<64x32xf32>
    %83 = arith.addf %80, %82 : vector<64x32xf32>
    %84 = vector.extract_strided_slice %45 {offsets = [0, 3], sizes = [64, 1], strides = [1, 1]} : vector<64x4xf32> to vector<64x1xf32>
    %85 = vector.broadcast %84 : vector<64x1xf32> to vector<64x32xf32>
    %86 = arith.mulf %85, %83 : vector<64x32xf32>
    %87 = arith.addf %77, %86 : vector<64x32xf32>
    %c0_35 = arith.constant 0 : index
    %c0_36 = arith.constant 0 : index
    %88 = vector.load %arg5[%c0_35, %c0_36] : memref<64x32xf32, #tpu.memory_space<vmem>>, vector<64x32xf32>
    tpu.vector_store %arg5[%c0_35, %c0_36], %87 {strides = array<i32>} : memref<64x32xf32, #tpu.memory_space<vmem>>, vector<64x32xf32>,
    return
  }
  func.func @transform_0(%arg0: i32) -> (i32, i32) {
    %c0_i32 = arith.constant 0 : i32
    %c0_i32_0 = arith.constant 0 : i32
    return %arg0, %c0_i32 : i32, i32
  }
  func.func @transform_1(%arg0: i32) -> (i32, i32) {
    %c0_i32 = arith.constant 0 : i32
    %c0_i32_0 = arith.constant 0 : i32
    %c0_i32_1 = arith.constant 0 : i32
    return %c0_i32, %c0_i32_0 : i32, i32
  }
  func.func @transform_2(%arg0: i32) -> (i32, i32, i32) {
    %c0_i32 = arith.constant 0 : i32
    %c0_i32_0 = arith.constant 0 : i32
    %c0_i32_1 = arith.constant 0 : i32
    %c0_i32_2 = arith.constant 0 : i32
    return %c0_i32, %c0_i32_0, %c0_i32_1 : i32, i32, i32
  }
  func.func @transform_3(%arg0: i32) -> (i32, i32) {
    %c0_i32 = arith.constant 0 : i32
    %c0_i32_0 = arith.constant 0 : i32
    %c0_i32_1 = arith.constant 0 : i32
    return %c0_i32, %c0_i32_0 : i32, i32
  }
  func.func @transform_4(%arg0: i32) -> (i32, i32) {
    %c0_i32 = arith.constant 0 : i32
    %c0_i32_0 = arith.constant 0 : i32
    return %arg0, %c0_i32 : i32, i32
  }
}

</mosaic_0001>

<llo_original>
// kernel: tpu_custom_call.1
$region0: #{tpu_custom_call.1}
  #allocation0 [shape = 'u32[]', space=smem, size = 0x4, offset = 0x4, fixed_abs, tag = 'smem constant byte address 0x4 - core index']
  #allocation1 [shape = 'u32[144,128]{1,0:T(1,128)}', space=vmem, size = 0x12000, scoped, tag = 'internal scratch']
  %s0 = inlined_call_operand.vmem [shape: f32[64,32], index: 0, kind: input, shape index: {}]
  %s1 = inlined_call_operand.vmem [shape: f32[32,4], index: 1, kind: input, shape index: {}]
  %s2 = inlined_call_operand.vmem [shape: bf16[4,32,32], index: 2, kind: input, shape index: {}]
  %s3 = inlined_call_operand.vmem [shape: f32[4,32], index: 3, kind: input, shape index: {}]
  %s4 = inlined_call_operand.vmem [shape: f32[64,32], index: 4, kind: output, shape index: {}]
  %s5 = sld [smem:[#allocation0]]
  $region26: #{tpu_custom_call.1} parent=0
    _
  %s7 = ssub.s32 1, %s5
  %s8 = scalar_select 0, %s7, %s5
  // Predicated region
  $region2: #{tpu_custom_call.1} parent=0 // pred_check
    _
  $region3: #{tpu_custom_call.1} parent=0 // pred_check_branch
    %10 = sbr.rel (0) target = $region5
  $region4: #{tpu_custom_call.1} parent=0 // pred_region
    _
  $region5: #{tpu_custom_call.1} parent=0 // pred_fallthru
    _
  // Predicated region
  $region6: #{tpu_custom_call.1} parent=0 // pred_check
    _
  $region7: #{tpu_custom_call.1} parent=0 // pred_check_branch
    %12 = sbr.rel (0) target = $region9
  $region8: #{tpu_custom_call.1} parent=0 // pred_region
    _
  $region9: #{tpu_custom_call.1} parent=0 // pred_fallthru
    _
  // Predicated region
  $region10: #{tpu_custom_call.1} parent=0 // pred_check
    _
  $region11: #{tpu_custom_call.1} parent=0 // pred_check_branch
    %14 = sbr.rel (0) target = $region13
  $region12: #{tpu_custom_call.1} parent=0 // pred_region
    _
  $region13: #{tpu_custom_call.1} parent=0 // pred_fallthru
    _
  // Predicated region
  $region14: #{tpu_custom_call.1} parent=0 // pred_check
    _
  $region15: #{tpu_custom_call.1} parent=0 // pred_check_branch
    %16 = sbr.rel (0) target = $region17
  $region16: #{tpu_custom_call.1} parent=0 // pred_region
    _
  $region17: #{tpu_custom_call.1} parent=0 // pred_fallthru
    _
  %v18 = vld [vmem:[%s0] sm:$0xff]
  %v19 = vld [vmem:[%s0 + $0x8] sm:$0xff]
  %v20 = vld [vmem:[%s0 + $0x10] sm:$0xff]
  %v21 = vld [vmem:[%s0 + $0x18] sm:$0xff]
  %v22 = vld [vmem:[%s0 + $0x20] sm:$0xff]
  %v23 = vld [vmem:[%s0 + $0x28] sm:$0xff]
  %v24 = vld [vmem:[%s0 + $0x30] sm:$0xff]
  %v25 = vld [vmem:[%s0 + $0x38] sm:$0xff]
  %v26 = vld [vmem:[%s1] sm:$0xff]
  %v27 = vld [vmem:[%s1 + $0x8] sm:$0xff]
  %v28 = vld [vmem:[%s1 + $0x10] sm:$0xff]
  %v29 = vld [vmem:[%s1 + $0x18] sm:$0xff]
  %vm30 = vcmask 261120
  %v32 = vsel %vm30, %v18, 0
  %v35 = vsel %vm30, %v19, 0
  %v38 = vsel %vm30, %v20, 0
  %v41 = vsel %vm30, %v21, 0
  %v44 = vsel %vm30, %v22, 0
  %v47 = vsel %vm30, %v23, 0
  %v50 = vsel %vm30, %v24, 0
  %v53 = vsel %vm30, %v25, 0
  %55 = vmatprep.subr.mxu0 0.0
  %56 = vmatpush1.msra.mxu0 %v26
  %57 = vmatprep.subr.mxu0 0.0
  %58 = vmatpush1.msra.mxu0 %v27
  %59 = vmatprep.subr.mxu0 0.0
  %60 = vmatpush1.msra.mxu0 %v28
  %61 = vmatprep.subr.mxu0 0.0
  %62 = vmatpush1.msra.mxu0 %v29
  %63 = vmatprep.subr.mxu0 0.0
  %64 = vmatpush1.msra.mxu0 0.0
  %65 = vmatprep.subr.mxu0 0.0
  %66 = vmatpush1.msra.mxu0 0.0
  %67 = vmatprep.subr.mxu0 0.0
  %68 = vmatpush1.msra.mxu0 0.0
  %69 = vmatprep.subr.mxu0 0.0
  %70 = vmatpush1.msra.mxu0 0.0
  %71 = vmatprep.subr.mxu0 0.0
  %72 = vmatpush1.msra.mxu0 0.0
  %73 = vmatprep.subr.mxu0 0.0
  %74 = vmatpush1.msra.mxu0 0.0
  %75 = vmatprep.subr.mxu0 0.0
  %76 = vmatpush1.msra.mxu0 0.0
  %77 = vmatprep.subr.mxu0 0.0
  %78 = vmatpush1.msra.mxu0 0.0
  %79 = vmatprep.subr.mxu0 0.0
  %80 = vmatpush1.msra.mxu0 0.0
  %81 = vmatprep.subr.mxu0 0.0
  %82 = vmatpush1.msra.mxu0 0.0
  %83 = vmatprep.subr.mxu0 0.0
  %84 = vmatpush1.msra.mxu0 0.0
  %85 = vmatprep.subr.mxu0 0.0
  %86 = vmatpush1.msra.mxu0 0.0
  %87 = vmatprep.subr.mxu0 0.0
  %88 = vmatpush1.msra.mxu0 0.0
  %89 = vmatprep.subr.mxu0 0.0
  %90 = vmatpush1.msra.mxu0 0.0
  %91 = vmatprep.subr.mxu0 0.0
  %92 = vmatpush1.msra.mxu0 0.0
  %93 = vmatprep.subr.mxu0 0.0
  %94 = vmatpush1.msra.mxu0 0.0
  %95 = vmatprep.subr.mxu0 0.0
  %96 = vmatpush1.msra.mxu0 0.0
  %97 = vmatprep.subr.mxu0 0.0
  %98 = vmatpush1.msra.mxu0 0.0
  %99 = vmatprep.subr.mxu0 0.0
  %100 = vmatpush1.msra.mxu0 0.0
  %101 = vmatprep.subr.mxu0 0.0
  %102 = vmatpush1.msra.mxu0 0.0
  %103 = vmatprep.subr.mxu0 0.0
  %104 = vmatpush1.msra.mxu0 0.0
  %105 = vmatprep.subr.mxu0 0.0
  %106 = vmatpush1.msra.mxu0 0.0
  %107 = vmatprep.subr.mxu0 0.0
  %108 = vmatpush1.msra.mxu0 0.0
  %109 = vmatprep.subr.mxu0 0.0
  %110 = vmatpush1.msra.mxu0 0.0
  %111 = vmatprep.subr.mxu0 0.0
  %112 = vmatpush1.msra.mxu0 0.0
  %113 = vmatprep.subr.mxu0 0.0
  %114 = vmatpush1.msra.mxu0 0.0
  %115 = vmatprep.subr.mxu0 0.0
  %116 = vmatpush1.msra.mxu0 0.0
  %117 = vmatprep.subr.mxu0 0.0
  %118 = vmatpush1.msra.mxu0 0.0
  %119 = vmatprep.mubr.f32.mxu0 0.0
  %120 = vmatmul.mubr.f32.gmra.mrb[0].mxu0 %v32
  %v121 = vpop.f32.mrb[0].mxu0
  %v122 = vadd.f32 0.0, %v121
  %v123 = vpop.f32.mrb[0].mxu0
  %124 = vmatprep.mubr.f32.mxu0 0.0
  %125 = vmatmul.mubr.f32.gmra.mrb[0].mxu0 %v35
  %v126 = vpop.f32.mrb[0].mxu0
  %v127 = vadd.f32 0.0, %v126
  %v128 = vpop.f32.mrb[0].mxu0
  %129 = vmatprep.mubr.f32.mxu0 0.0
  %130 = vmatmul.mubr.f32.gmra.mrb[0].mxu0 %v38
  %v131 = vpop.f32.mrb[0].mxu0
  %v132 = vadd.f32 0.0, %v131
  %v133 = vpop.f32.mrb[0].mxu0
  %134 = vmatprep.mubr.f32.mxu0 0.0
  %135 = vmatmul.mubr.f32.gmra.mrb[0].mxu0 %v41
  %v136 = vpop.f32.mrb[0].mxu0
  %v137 = vadd.f32 0.0, %v136
  %v138 = vpop.f32.mrb[0].mxu0
  %139 = vmatprep.mubr.f32.mxu0 0.0
  %140 = vmatmul.mubr.f32.gmra.mrb[0].mxu0 %v44
  %v141 = vpop.f32.mrb[0].mxu0
  %v142 = vadd.f32 0.0, %v141
  %v143 = vpop.f32.mrb[0].mxu0
  %144 = vmatprep.mubr.f32.mxu0 0.0
  %145 = vmatmul.mubr.f32.gmra.mrb[0].mxu0 %v47
  %v146 = vpop.f32.mrb[0].mxu0
  %v147 = vadd.f32 0.0, %v146
  %v148 = vpop.f32.mrb[0].mxu0
  %149 = vmatprep.mubr.f32.mxu0 0.0
  %150 = vmatmul.mubr.f32.gmra.mrb[0].mxu0 %v50
  %v151 = vpop.f32.mrb[0].mxu0
  %v152 = vadd.f32 0.0, %v151
  %v153 = vpop.f32.mrb[0].mxu0
  %154 = vmatprep.mubr.f32.mxu0 0.0
  %155 = vmatmul.mubr.f32.gmra.mrb[0].mxu0 %v53
  %v156 = vpop.f32.mrb[0].mxu0
  %v157 = vadd.f32 0.0, %v156
  %v158 = vpop.f32.mrb[0].mxu0
  %159 = vdwg.mxu0
  %v160 = vlaneseq
  %v161 = vand.u32 %v160, 127
  %vm162 = vcmask 31744
  %v163 = vsel %vm162, %v122, -inf
  %164 = vmax.xlane.f32.xlu0 %v163
  %v165 = vpop.xlane.xlu0 %164
  %v166 = vsel %vm162, %v127, -inf
  %167 = vmax.xlane.f32.xlu0 %v166
  %v168 = vpop.xlane.xlu0 %167
  %v169 = vsel %vm162, %v132, -inf
  %170 = vmax.xlane.f32.xlu0 %v169
  %v171 = vpop.xlane.xlu0 %170
  %v172 = vsel %vm162, %v137, -inf
  %173 = vmax.xlane.f32.xlu0 %v172
  %v174 = vpop.xlane.xlu0 %173
  %v175 = vsel %vm162, %v142, -inf
  %176 = vmax.xlane.f32.xlu0 %v175
  %v177 = vpop.xlane.xlu0 %176
  %v178 = vsel %vm162, %v147, -inf
  %179 = vmax.xlane.f32.xlu0 %v178
  %v180 = vpop.xlane.xlu0 %179
  %v181 = vsel %vm162, %v152, -inf
  %182 = vmax.xlane.f32.xlu0 %v181
  %v183 = vpop.xlane.xlu0 %182
  %v184 = vsel %vm162, %v157, -inf
  %185 = vmax.xlane.f32.xlu0 %v184
  %v186 = vpop.xlane.xlu0 %185
  %vm187 = vcmp.eq.f32.partialorder %v122, %v165
  %vm188 = vcmp.eq.f32.partialorder %v127, %v168
  %vm189 = vcmp.eq.f32.partialorder %v132, %v171
  %vm190 = vcmp.eq.f32.partialorder %v137, %v174
  %vm191 = vcmp.eq.f32.partialorder %v142, %v177
  %vm192 = vcmp.eq.f32.partialorder %v147, %v180
  %vm193 = vcmp.eq.f32.partialorder %v152, %v183
  %vm194 = vcmp.eq.f32.partialorder %v157, %v186
  %v195 = vsel %vm187, %v161, 4
  %v196 = vsel %vm188, %v161, 4
  %v197 = vsel %vm189, %v161, 4
  %v198 = vsel %vm190, %v161, 4
  %v199 = vsel %vm191, %v161, 4
  %v200 = vsel %vm192, %v161, 4
  %v201 = vsel %vm193, %v161, 4
  %v202 = vsel %vm194, %v161, 4
  %v203 = vsel %vm162, %v195, 2147483647
  %v204 = vand.u32 %v203, 65535
  %v205 = vshra.s32 %v203, 16
  %v206 = vcvt.s32.f32 %v204
  %v207 = vcvt.s32.f32 %v205
  %208 = vmin.xlane.f32.xlu0 %v207
  %v209 = vpop.xlane.xlu0 %208
  %vm210 = vcmp.eq.f32.partialorder %v207, %v209
  %v211 = vsel %vm210, %v206, inf
  %212 = vmin.xlane.f32.xlu0 %v211
  %v213 = vpop.xlane.xlu0 %212
  %v214 = vcvt.f32.s32 %v213
  %v215 = vcvt.f32.s32 %v209
  %v216 = vshll.u32 %v215, 16
  %v217 = vadd.s32 %v216, %v214
  %v218 = vsel %vm162, %v196, 2147483647
  %v219 = vand.u32 %v218, 65535
  %v220 = vshra.s32 %v218, 16
  %v221 = vcvt.s32.f32 %v219
  %v222 = vcvt.s32.f32 %v220
  %223 = vmin.xlane.f32.xlu0 %v222
  %v224 = vpop.xlane.xlu0 %223
  %vm225 = vcmp.eq.f32.partialorder %v222, %v224
  %v226 = vsel %vm225, %v221, inf
  %227 = vmin.xlane.f32.xlu0 %v226
  %v228 = vpop.xlane.xlu0 %227
  %v229 = vcvt.f32.s32 %v228
  %v230 = vcvt.f32.s32 %v224
  %v231 = vshll.u32 %v230, 16
  %v232 = vadd.s32 %v231, %v229
  %v233 = vsel %vm162, %v197, 2147483647
  %v234 = vand.u32 %v233, 65535
  %v235 = vshra.s32 %v233, 16
  %v236 = vcvt.s32.f32 %v234
  %v237 = vcvt.s32.f32 %v235
  %238 = vmin.xlane.f32.xlu0 %v237
  %v239 = vpop.xlane.xlu0 %238
  %vm240 = vcmp.eq.f32.partialorder %v237, %v239
  %v241 = vsel %vm240, %v236, inf
  %242 = vmin.xlane.f32.xlu0 %v241
  %v243 = vpop.xlane.xlu0 %242
  %v244 = vcvt.f32.s32 %v243
  %v245 = vcvt.f32.s32 %v239
  %v246 = vshll.u32 %v245, 16
  %v247 = vadd.s32 %v246, %v244
  %v248 = vsel %vm162, %v198, 2147483647
  %v249 = vand.u32 %v248, 65535
  %v250 = vshra.s32 %v248, 16
  %v251 = vcvt.s32.f32 %v249
  %v252 = vcvt.s32.f32 %v250
  %253 = vmin.xlane.f32.xlu0 %v252
  %v254 = vpop.xlane.xlu0 %253
  %vm255 = vcmp.eq.f32.partialorder %v252, %v254
  %v256 = vsel %vm255, %v251, inf
  %257 = vmin.xlane.f32.xlu0 %v256
  %v258 = vpop.xlane.xlu0 %257
  %v259 = vcvt.f32.s32 %v258
  %v260 = vcvt.f32.s32 %v254
  %v261 = vshll.u32 %v260, 16
  %v262 = vadd.s32 %v261, %v259
  %v263 = vsel %vm162, %v199, 2147483647
  %v264 = vand.u32 %v263, 65535
  %v265 = vshra.s32 %v263, 16
  %v266 = vcvt.s32.f32 %v264
  %v267 = vcvt.s32.f32 %v265
  %268 = vmin.xlane.f32.xlu0 %v267
  %v269 = vpop.xlane.xlu0 %268
  %vm270 = vcmp.eq.f32.partialorder %v267, %v269
  %v271 = vsel %vm270, %v266, inf
  %272 = vmin.xlane.f32.xlu0 %v271
  %v273 = vpop.xlane.xlu0 %272
  %v274 = vcvt.f32.s32 %v273
  %v275 = vcvt.f32.s32 %v269
  %v276 = vshll.u32 %v275, 16
  %v277 = vadd.s32 %v276, %v274
  %v278 = vsel %vm162, %v200, 2147483647
  %v279 = vand.u32 %v278, 65535
  %v280 = vshra.s32 %v278, 16
  %v281 = vcvt.s32.f32 %v279
  %v282 = vcvt.s32.f32 %v280
  %283 = vmin.xlane.f32.xlu0 %v282
  %v284 = vpop.xlane.xlu0 %283
  %vm285 = vcmp.eq.f32.partialorder %v282, %v284
  %v286 = vsel %vm285, %v281, inf
  %287 = vmin.xlane.f32.xlu0 %v286
  %v288 = vpop.xlane.xlu0 %287
  %v289 = vcvt.f32.s32 %v288
  %v290 = vcvt.f32.s32 %v284
  %v291 = vshll.u32 %v290, 16
  %v292 = vadd.s32 %v291, %v289
  %v293 = vsel %vm162, %v201, 2147483647
  %v294 = vand.u32 %v293, 65535
  %v295 = vshra.s32 %v293, 16
  %v296 = vcvt.s32.f32 %v294
  %v297 = vcvt.s32.f32 %v295
  %298 = vmin.xlane.f32.xlu0 %v297
  %v299 = vpop.xlane.xlu0 %298
  %vm300 = vcmp.eq.f32.partialorder %v297, %v299
  %v301 = vsel %vm300, %v296, inf
  %302 = vmin.xlane.f32.xlu0 %v301
  %v303 = vpop.xlane.xlu0 %302
  %v304 = vcvt.f32.s32 %v303
  %v305 = vcvt.f32.s32 %v299
  %v306 = vshll.u32 %v305, 16
  %v307 = vadd.s32 %v306, %v304
  %v308 = vsel %vm162, %v202, 2147483647
  %v309 = vand.u32 %v308, 65535
  %v310 = vshra.s32 %v308, 16
  %v311 = vcvt.s32.f32 %v309
  %v312 = vcvt.s32.f32 %v310
  %313 = vmin.xlane.f32.xlu0 %v312
  %v314 = vpop.xlane.xlu0 %313
  %vm315 = vcmp.eq.f32.partialorder %v312, %v314
  %v316 = vsel %vm315, %v311, inf
  %317 = vmin.xlane.f32.xlu0 %v316
  %v318 = vpop.xlane.xlu0 %317
  %v319 = vcvt.f32.s32 %v318
  %v320 = vcvt.f32.s32 %v314
  %v321 = vshll.u32 %v320, 16
  %v322 = vadd.s32 %v321, %v319
  %vm323 = vcmp.eq.s32.totalorder %v161, %v217
  %vm324 = vcmp.eq.s32.totalorder %v161, %v232
  %vm325 = vcmp.eq.s32.totalorder %v161, %v247
  %vm326 = vcmp.eq.s32.totalorder %v161, %v262
  %vm327 = vcmp.eq.s32.totalorder %v161, %v277
  %vm328 = vcmp.eq.s32.totalorder %v161, %v292
  %vm329 = vcmp.eq.s32.totalorder %v161, %v307
  %vm330 = vcmp.eq.s32.totalorder %v161, %v322
  %v331 = vsub.f32 %v165, %v165
  %v332 = vsub.f32 %v168, %v168
  %v333 = vsub.f32 %v171, %v171
  %v334 = vsub.f32 %v174, %v174
  %v335 = vsub.f32 %v177, %v177
  %v336 = vsub.f32 %v180, %v180
  %v337 = vsub.f32 %v183, %v183
  %v338 = vsub.f32 %v186, %v186
  %v339 = vmul.f32 %v331, 1.442695
  %v340 = vpow.pop %v339
  %v341 = vmul.f32 %v332, 1.442695
  %v342 = vpow.pop %v341
  %v343 = vmul.f32 %v333, 1.442695
  %v344 = vpow.pop %v343
  %v345 = vmul.f32 %v334, 1.442695
  %v346 = vpow.pop %v345
  %v347 = vmul.f32 %v335, 1.442695
  %v348 = vpow.pop %v347
  %v349 = vmul.f32 %v336, 1.442695
  %v350 = vpow.pop %v349
  %v351 = vmul.f32 %v337, 1.442695
  %v352 = vpow.pop %v351
  %v353 = vmul.f32 %v338, 1.442695
  %v354 = vpow.pop %v353
  %v355 = vsel %vm323, %v340, 0.0
  %v356 = vsel %vm324, %v342, 0.0
  %v357 = vsel %vm325, %v344, 0.0
  %v358 = vsel %vm326, %v346, 0.0
  %v359 = vsel %vm327, %v348, 0.0
  %v360 = vsel %vm328, %v350, 0.0
  %v361 = vsel %vm329, %v352, 0.0
  %v362 = vsel %vm330, %v354, 0.0
  %v363 = vadd.f32 %v355, 0.0
  %v364 = vadd.f32 %v356, 0.0
  %v365 = vadd.f32 %v357, 0.0
  %v366 = vadd.f32 %v358, 0.0
  %v367 = vadd.f32 %v359, 0.0
  %v368 = vadd.f32 %v360, 0.0
  %v369 = vadd.f32 %v361, 0.0
  %v370 = vadd.f32 %v362, 0.0
  %v371 = vadd.f32 %v340, 0.0
  %v372 = vadd.f32 %v342, 0.0
  %v373 = vadd.f32 %v344, 0.0
  %v374 = vadd.f32 %v346, 0.0
  %v375 = vadd.f32 %v348, 0.0
  %v376 = vadd.f32 %v350, 0.0
  %v377 = vadd.f32 %v352, 0.0
  %v378 = vadd.f32 %v354, 0.0
  %v379 = vsel %vm323, -inf, %v122
  %v380 = vsel %vm324, -inf, %v127
  %v381 = vsel %vm325, -inf, %v132
  %v382 = vsel %vm326, -inf, %v137
  %v383 = vsel %vm327, -inf, %v142
  %v384 = vsel %vm328, -inf, %v147
  %v385 = vsel %vm329, -inf, %v152
  %v386 = vsel %vm330, -inf, %v157
  %v387 = vsel %vm162, %v379, -inf
  %388 = vmax.xlane.f32.xlu0 %v387
  %v389 = vpop.xlane.xlu0 %388
  %v390 = vsel %vm162, %v380, -inf
  %391 = vmax.xlane.f32.xlu0 %v390
  %v392 = vpop.xlane.xlu0 %391
  %v393 = vsel %vm162, %v381, -inf
  %394 = vmax.xlane.f32.xlu0 %v393
  %v395 = vpop.xlane.xlu0 %394
  %v396 = vsel %vm162, %v382, -inf
  %397 = vmax.xlane.f32.xlu0 %v396
  %v398 = vpop.xlane.xlu0 %397
  %v399 = vsel %vm162, %v383, -inf
  %400 = vmax.xlane.f32.xlu0 %v399
  %v401 = vpop.xlane.xlu0 %400
  %v402 = vsel %vm162, %v384, -inf
  %403 = vmax.xlane.f32.xlu0 %v402
  %v404 = vpop.xlane.xlu0 %403
  %v405 = vsel %vm162, %v385, -inf
  %406 = vmax.xlane.f32.xlu0 %v405
  %v407 = vpop.xlane.xlu0 %406
  %v408 = vsel %vm162, %v386, -inf
  %409 = vmax.xlane.f32.xlu0 %v408
  %v410 = vpop.xlane.xlu0 %409
  %vm411 = vcmp.eq.f32.partialorder %v379, %v389
  %vm412 = vcmp.eq.f32.partialorder %v380, %v392
  %vm413 = vcmp.eq.f32.partialorder %v381, %v395
  %vm414 = vcmp.eq.f32.partialorder %v382, %v398
  %vm415 = vcmp.eq.f32.partialorder %v383, %v401
  %vm416 = vcmp.eq.f32.partialorder %v384, %v404
  %vm417 = vcmp.eq.f32.partialorder %v385, %v407
  %vm418 = vcmp.eq.f32.partialorder %v386, %v410
  %v419 = vsel %vm411, %v161, 4
  %v420 = vsel %vm412, %v161, 4
  %v421 = vsel %vm413, %v161, 4
  %v422 = vsel %vm414, %v161, 4
  %v423 = vsel %vm415, %v161, 4
  %v424 = vsel %vm416, %v161, 4
  %v425 = vsel %vm417, %v161, 4
  %v426 = vsel %vm418, %v161, 4
  %v427 = vsel %vm162, %v419, 2147483647
  %v428 = vand.u32 %v427, 65535
  %v429 = vshra.s32 %v427, 16
  %v430 = vcvt.s32.f32 %v428
  %v431 = vcvt.s32.f32 %v429
  %432 = vmin.xlane.f32.xlu0 %v431
  %v433 = vpop.xlane.xlu0 %432
  %vm434 = vcmp.eq.f32.partialorder %v431, %v433
  %v435 = vsel %vm434, %v430, inf
  %436 = vmin.xlane.f32.xlu0 %v435
  %v437 = vpop.xlane.xlu0 %436
  %v438 = vcvt.f32.s32 %v437
  %v439 = vcvt.f32.s32 %v433
  %v440 = vshll.u32 %v439, 16
  %v441 = vadd.s32 %v440, %v438
  %v442 = vsel %vm162, %v420, 2147483647
  %v443 = vand.u32 %v442, 65535
  %v444 = vshra.s32 %v442, 16
  %v445 = vcvt.s32.f32 %v443
  %v446 = vcvt.s32.f32 %v444
  %447 = vmin.xlane.f32.xlu0 %v446
  %v448 = vpop.xlane.xlu0 %447
  %vm449 = vcmp.eq.f32.partialorder %v446, %v448
  %v450 = vsel %vm449, %v445, inf
  %451 = vmin.xlane.f32.xlu0 %v450
  %v452 = vpop.xlane.xlu0 %451
  %v453 = vcvt.f32.s32 %v452
  %v454 = vcvt.f32.s32 %v448
  %v455 = vshll.u32 %v454, 16
  %v456 = vadd.s32 %v455, %v453
  %v457 = vsel %vm162, %v421, 2147483647
  %v458 = vand.u32 %v457, 65535
  %v459 = vshra.s32 %v457, 16
  %v460 = vcvt.s32.f32 %v458
  %v461 = vcvt.s32.f32 %v459
  %462 = vmin.xlane.f32.xlu0 %v461
  %v463 = vpop.xlane.xlu0 %462
  %vm464 = vcmp.eq.f32.partialorder %v461, %v463
  %v465 = vsel %vm464, %v460, inf
  %466 = vmin.xlane.f32.xlu0 %v465
  %v467 = vpop.xlane.xlu0 %466
  %v468 = vcvt.f32.s32 %v467
  %v469 = vcvt.f32.s32 %v463
  %v470 = vshll.u32 %v469, 16
  %v471 = vadd.s32 %v470, %v468
  %v472 = vsel %vm162, %v422, 2147483647
  %v473 = vand.u32 %v472, 65535
  %v474 = vshra.s32 %v472, 16
  %v475 = vcvt.s32.f32 %v473
  %v476 = vcvt.s32.f32 %v474
  %477 = vmin.xlane.f32.xlu0 %v476
  %v478 = vpop.xlane.xlu0 %477
  %vm479 = vcmp.eq.f32.partialorder %v476, %v478
  %v480 = vsel %vm479, %v475, inf
  %481 = vmin.xlane.f32.xlu0 %v480
  %v482 = vpop.xlane.xlu0 %481
  %v483 = vcvt.f32.s32 %v482
  %v484 = vcvt.f32.s32 %v478
  %v485 = vshll.u32 %v484, 16
  %v486 = vadd.s32 %v485, %v483
  %v487 = vsel %vm162, %v423, 2147483647
  %v488 = vand.u32 %v487, 65535
  %v489 = vshra.s32 %v487, 16
  %v490 = vcvt.s32.f32 %v488
  %v491 = vcvt.s32.f32 %v489
  %492 = vmin.xlane.f32.xlu0 %v491
  %v493 = vpop.xlane.xlu0 %492
  %vm494 = vcmp.eq.f32.partialorder %v491, %v493
  %v495 = vsel %vm494, %v490, inf
  %496 = vmin.xlane.f32.xlu0 %v495
  %v497 = vpop.xlane.xlu0 %496
  %v498 = vcvt.f32.s32 %v497
  %v499 = vcvt.f32.s32 %v493
  %v500 = vshll.u32 %v499, 16
  %v501 = vadd.s32 %v500, %v498
  %v502 = vsel %vm162, %v424, 2147483647
  %v503 = vand.u32 %v502, 65535
  %v504 = vshra.s32 %v502, 16
  %v505 = vcvt.s32.f32 %v503
  %v506 = vcvt.s32.f32 %v504
  %507 = vmin.xlane.f32.xlu0 %v506
  %v508 = vpop.xlane.xlu0 %507
  %vm509 = vcmp.eq.f32.partialorder %v506, %v508
  %v510 = vsel %vm509, %v505, inf
  %511 = vmin.xlane.f32.xlu0 %v510
  %v512 = vpop.xlane.xlu0 %511
  %v513 = vcvt.f32.s32 %v512
  %v514 = vcvt.f32.s32 %v508
  %v515 = vshll.u32 %v514, 16
  %v516 = vadd.s32 %v515, %v513
  %v517 = vsel %vm162, %v425, 2147483647
  %v518 = vand.u32 %v517, 65535
  %v519 = vshra.s32 %v517, 16
  %v520 = vcvt.s32.f32 %v518
  %v521 = vcvt.s32.f32 %v519
  %522 = vmin.xlane.f32.xlu0 %v521
  %v523 = vpop.xlane.xlu0 %522
  %vm524 = vcmp.eq.f32.partialorder %v521, %v523
  %v525 = vsel %vm524, %v520, inf
  %526 = vmin.xlane.f32.xlu0 %v525
  %v527 = vpop.xlane.xlu0 %526
  %v528 = vcvt.f32.s32 %v527
  %v529 = vcvt.f32.s32 %v523
  %v530 = vshll.u32 %v529, 16
  %v531 = vadd.s32 %v530, %v528
  %v532 = vsel %vm162, %v426, 2147483647
  %v533 = vand.u32 %v532, 65535
  %v534 = vshra.s32 %v532, 16
  %v535 = vcvt.s32.f32 %v533
  %v536 = vcvt.s32.f32 %v534
  %537 = vmin.xlane.f32.xlu0 %v536
  %v538 = vpop.xlane.xlu0 %537
  %vm539 = vcmp.eq.f32.partialorder %v536, %v538
  %v540 = vsel %vm539, %v535, inf
  %541 = vmin.xlane.f32.xlu0 %v540
  %v542 = vpop.xlane.xlu0 %541
  %v543 = vcvt.f32.s32 %v542
  %v544 = vcvt.f32.s32 %v538
  %v545 = vshll.u32 %v544, 16
  %v546 = vadd.s32 %v545, %v543
  %vm547 = vcmp.eq.s32.totalorder %v161, %v441
  %vm548 = vcmp.eq.s32.totalorder %v161, %v456
  %vm549 = vcmp.eq.s32.totalorder %v161, %v471
  %vm550 = vcmp.eq.s32.totalorder %v161, %v486
  %vm551 = vcmp.eq.s32.totalorder %v161, %v501
  %vm552 = vcmp.eq.s32.totalorder %v161, %v516
  %vm553 = vcmp.eq.s32.totalorder %v161, %v531
  %vm554 = vcmp.eq.s32.totalorder %v161, %v546
  %v555 = vsub.f32 %v389, %v165
  %v556 = vsub.f32 %v392, %v168
  %v557 = vsub.f32 %v395, %v171
  %v558 = vsub.f32 %v398, %v174
  %v559 = vsub.f32 %v401, %v177
  %v560 = vsub.f32 %v404, %v180
  %v561 = vsub.f32 %v407, %v183
  %v562 = vsub.f32 %v410, %v186
  %v563 = vmul.f32 %v555, 1.442695
  %v564 = vpow.pop %v563
  %v565 = vmul.f32 %v556, 1.442695
  %v566 = vpow.pop %v565
  %v567 = vmul.f32 %v557, 1.442695
  %v568 = vpow.pop %v567
  %v569 = vmul.f32 %v558, 1.442695
  %v570 = vpow.pop %v569
  %v571 = vmul.f32 %v559, 1.442695
  %v572 = vpow.pop %v571
  %v573 = vmul.f32 %v560, 1.442695
  %v574 = vpow.pop %v573
  %v575 = vmul.f32 %v561, 1.442695
  %v576 = vpow.pop %v575
  %v577 = vmul.f32 %v562, 1.442695
  %v578 = vpow.pop %v577
  %v579 = vsel %vm547, %v564, 0.0
  %v580 = vsel %vm548, %v566, 0.0
  %v581 = vsel %vm549, %v568, 0.0
  %v582 = vsel %vm550, %v570, 0.0
  %v583 = vsel %vm551, %v572, 0.0
  %v584 = vsel %vm552, %v574, 0.0
  %v585 = vsel %vm553, %v576, 0.0
  %v586 = vsel %vm554, %v578, 0.0
  %v587 = vadd.f32 %v363, %v579
  %v588 = vadd.f32 %v364, %v580
  %v589 = vadd.f32 %v365, %v581
  %v590 = vadd.f32 %v366, %v582
  %v591 = vadd.f32 %v367, %v583
  %v592 = vadd.f32 %v368, %v584
  %v593 = vadd.f32 %v369, %v585
  %v594 = vadd.f32 %v370, %v586
  %v595 = vadd.f32 %v371, %v564
  %v596 = vadd.f32 %v372, %v566
  %v597 = vadd.f32 %v373, %v568
  %v598 = vadd.f32 %v374, %v570
  %v599 = vadd.f32 %v375, %v572
  %v600 = vadd.f32 %v376, %v574
  %v601 = vadd.f32 %v377, %v576
  %v602 = vadd.f32 %v378, %v578
  %v603 = vrcp.pop %v595
  %v604 = vmul.f32 %v587, %v603
  %v605 = vrcp.pop %v596
  %v606 = vmul.f32 %v588, %v605
  %v607 = vrcp.pop %v597
  %v608 = vmul.f32 %v589, %v607
  %v609 = vrcp.pop %v598
  %v610 = vmul.f32 %v590, %v609
  %v611 = vrcp.pop %v599
  %v612 = vmul.f32 %v591, %v611
  %v613 = vrcp.pop %v600
  %v614 = vmul.f32 %v592, %v613
  %v615 = vrcp.pop %v601
  %v616 = vmul.f32 %v593, %v615
  %v617 = vrcp.pop %v602
  %v618 = vmul.f32 %v594, %v617
  %v619 = vpack.c.bf16 %v19, %v18
  %v620 = vpack.c.bf16 %v21, %v20
  %v621 = vpack.c.bf16 %v23, %v22
  %v622 = vpack.c.bf16 %v25, %v24
  %v623 = vld [vmem:[%s2] sm:$0xf]
  %v624 = vld [vmem:[%s2 + $0x4] sm:$0xf]
  %v625 = vld [vmem:[%s2 + $0x8] sm:$0xf]
  %v626 = vld [vmem:[%s2 + $0xc] sm:$0xf]
  %v627 = vld [vmem:[%s3] sm:$0x1]
  %v628 = vlaneseq
  %v629 = vshrl.u32 %v628, 7
  %v630 = vsub.s32 0, %v629
  %v631 = vrot.slane %v627, %v630
  %v636 = vunpack.c.l.b16 %v623
  %v637 = vunpack.c.l.b16 %v624
  %v638 = vunpack.c.l.b16 %v625
  %v639 = vunpack.c.l.b16 %v626
  %v640 = vpack.c.b16 %v637, %v636
  %v641 = vpack.c.b16 %v639, %v638
  %v645 = vsel %vm30, %v619, 0
  %v648 = vsel %vm30, %v620, 0
  %v651 = vsel %vm30, %v621, 0
  %v654 = vsel %vm30, %v622, 0
  %656 = vmatprep.subr.bf16.mxu0 0
  %657 = vmatpush1.bf16.msra.mxu0 %v640
  %658 = vmatprep.subr.bf16.mxu0 0
  %659 = vmatpush1.bf16.msra.mxu0 %v641
  %660 = vmatprep.subr.bf16.mxu0 0
  %661 = vmatpush1.bf16.msra.mxu0 0
  %662 = vmatprep.subr.bf16.mxu0 0
  %663 = vmatpush1.bf16.msra.mxu0 0
  %664 = vmatprep.subr.bf16.mxu0 0
  %665 = vmatpush1.bf16.msra.mxu0 0
  %666 = vmatprep.subr.bf16.mxu0 0
  %667 = vmatpush1.bf16.msra.mxu0 0
  %668 = vmatprep.subr.bf16.mxu0 0
  %669 = vmatpush1.bf16.msra.mxu0 0
  %670 = vmatprep.subr.bf16.mxu0 0
  %671 = vmatpush1.bf16.msra.mxu0 0
  %672 = vmatprep.subr.bf16.mxu0 0
  %673 = vmatpush1.bf16.msra.mxu0 0
  %674 = vmatprep.subr.bf16.mxu0 0
  %675 = vmatpush1.bf16.msra.mxu0 0
  %676 = vmatprep.subr.bf16.mxu0 0
  %677 = vmatpush1.bf16.msra.mxu0 0
  %678 = vmatprep.subr.bf16.mxu0 0
  %679 = vmatpush1.bf16.msra.mxu0 0
  %680 = vmatprep.subr.bf16.mxu0 0
  %681 = vmatpush1.bf16.msra.mxu0 0
  %682 = vmatprep.subr.bf16.mxu0 0
  %683 = vmatpush1.bf16.msra.mxu0 0
  %684 = vmatprep.subr.bf16.mxu0 0
  %685 = vmatpush1.bf16.msra.mxu0 0
  %686 = vmatprep.subr.bf16.mxu0 0
  %687 = vmatpush1.bf16.msra.mxu0 0
  %688 = vmatprep.mubr.bf16.mxu0 0
  %689 = vmatmul.mubr.bf16.gmra.mrb[0].mxu0 %v645
  %v690 = vpop.f32.mrb[0].mxu0
  %v691 = vadd.f32 %v631, %v690
  %v692 = vpop.f32.mrb[0].mxu0
  %v693 = vpop.f32.mrb[0].mxu0
  %v694 = vadd.f32 %v631, %v693
  %v695 = vpop.f32.mrb[0].mxu0
  %696 = vmatprep.mubr.bf16.mxu0 0
  %697 = vmatmul.mubr.bf16.gmra.mrb[0].mxu0 %v648
  %v698 = vpop.f32.mrb[0].mxu0
  %v699 = vadd.f32 %v631, %v698
  %v700 = vpop.f32.mrb[0].mxu0
  %v701 = vpop.f32.mrb[0].mxu0
  %v702 = vadd.f32 %v631, %v701
  %v703 = vpop.f32.mrb[0].mxu0
  %704 = vmatprep.mubr.bf16.mxu0 0
  %705 = vmatmul.mubr.bf16.gmra.mrb[0].mxu0 %v651
  %v706 = vpop.f32.mrb[0].mxu0
  %v707 = vadd.f32 %v631, %v706
  %v708 = vpop.f32.mrb[0].mxu0
  %v709 = vpop.f32.mrb[0].mxu0
  %v710 = vadd.f32 %v631, %v709
  %v711 = vpop.f32.mrb[0].mxu0
  %712 = vmatprep.mubr.bf16.mxu0 0
  %713 = vmatmul.mubr.bf16.gmra.mrb[0].mxu0 %v654
  %v714 = vpop.f32.mrb[0].mxu0
  %v715 = vadd.f32 %v631, %v714
  %v716 = vpop.f32.mrb[0].mxu0
  %v717 = vpop.f32.mrb[0].mxu0
  %v718 = vadd.f32 %v631, %v717
  %v719 = vpop.f32.mrb[0].mxu0
  %720 = vdwg.mxu0
  %722 = vset.pattern.permute.xlu0 0
  %723 = vperm.xlu0 %722, %v604
  %v724 = vpop.permute.xlu0 %723
  %727 = vset.pattern.permute.xlu0 0
  %728 = vperm.xlu0 %727, %v606
  %v729 = vpop.permute.xlu0 %728
  %732 = vset.pattern.permute.xlu0 0
  %733 = vperm.xlu0 %732, %v608
  %v734 = vpop.permute.xlu0 %733
  %737 = vset.pattern.permute.xlu0 0
  %738 = vperm.xlu0 %737, %v610
  %v739 = vpop.permute.xlu0 %738
  %742 = vset.pattern.permute.xlu0 0
  %743 = vperm.xlu0 %742, %v612
  %v744 = vpop.permute.xlu0 %743
  %747 = vset.pattern.permute.xlu0 0
  %748 = vperm.xlu0 %747, %v614
  %v749 = vpop.permute.xlu0 %748
  %752 = vset.pattern.permute.xlu0 0
  %753 = vperm.xlu0 %752, %v616
  %v754 = vpop.permute.xlu0 %753
  %757 = vset.pattern.permute.xlu0 0
  %758 = vperm.xlu0 %757, %v618
  %v759 = vpop.permute.xlu0 %758
  %v761 = vmul.f32 %v724, %v691
  %v762 = vmul.f32 %v729, %v694
  %v763 = vmul.f32 %v734, %v699
  %v764 = vmul.f32 %v739, %v702
  %v765 = vmul.f32 %v744, %v707
  %v766 = vmul.f32 %v749, %v710
  %v767 = vmul.f32 %v754, %v715
  %v768 = vmul.f32 %v759, %v718
  %v769 = vadd.f32 %v761, 0.0
  %v770 = vadd.f32 %v762, 0.0
  %v771 = vadd.f32 %v763, 0.0
  %v772 = vadd.f32 %v764, 0.0
  %v773 = vadd.f32 %v765, 0.0
  %v774 = vadd.f32 %v766, 0.0
  %v775 = vadd.f32 %v767, 0.0
  %v776 = vadd.f32 %v768, 0.0
  %s777 = scalar_lea.vmem %s2, 16
  %v778 = vld [vmem:[%s777] sm:$0xf]
  %v779 = vld [vmem:[%s777 + $0x4] sm:$0xf]
  %v780 = vld [vmem:[%s777 + $0x8] sm:$0xf]
  %v781 = vld [vmem:[%s777 + $0xc] sm:$0xf]
  %v782 = vld [vmem:[%s3 + $0x1] sm:$0x1]
  %v783 = vlaneseq
  %v784 = vshrl.u32 %v783, 7
  %v785 = vsub.s32 0, %v784
  %v786 = vrot.slane %v782, %v785
  %v791 = vunpack.c.l.b16 %v778
  %v792 = vunpack.c.l.b16 %v779
  %v793 = vunpack.c.l.b16 %v780
  %v794 = vunpack.c.l.b16 %v781
  %v795 = vpack.c.b16 %v792, %v791
  %v796 = vpack.c.b16 %v794, %v793
  %799 = vmatprep.subr.bf16.mxu0 0
  %800 = vmatpush1.bf16.msra.mxu0 %v795
  %801 = vmatprep.subr.bf16.mxu0 0
  %802 = vmatpush1.bf16.msra.mxu0 %v796
  %803 = vmatprep.subr.bf16.mxu0 0
  %804 = vmatpush1.bf16.msra.mxu0 0
  %805 = vmatprep.subr.bf16.mxu0 0
  %806 = vmatpush1.bf16.msra.mxu0 0
  %807 = vmatprep.subr.bf16.mxu0 0
  %808 = vmatpush1.bf16.msra.mxu0 0
  %809 = vmatprep.subr.bf16.mxu0 0
  %810 = vmatpush1.bf16.msra.mxu0 0
  %811 = vmatprep.subr.bf16.mxu0 0
  %812 = vmatpush1.bf16.msra.mxu0 0
  %813 = vmatprep.subr.bf16.mxu0 0
  %814 = vmatpush1.bf16.msra.mxu0 0
  %815 = vmatprep.subr.bf16.mxu0 0
  %816 = vmatpush1.bf16.msra.mxu0 0
  %817 = vmatprep.subr.bf16.mxu0 0
  %818 = vmatpush1.bf16.msra.mxu0 0
  %819 = vmatprep.subr.bf16.mxu0 0
  %820 = vmatpush1.bf16.msra.mxu0 0
  %821 = vmatprep.subr.bf16.mxu0 0
  %822 = vmatpush1.bf16.msra.mxu0 0
  %823 = vmatprep.subr.bf16.mxu0 0
  %824 = vmatpush1.bf16.msra.mxu0 0
  %825 = vmatprep.subr.bf16.mxu0 0
  %826 = vmatpush1.bf16.msra.mxu0 0
  %827 = vmatprep.subr.bf16.mxu0 0
  %828 = vmatpush1.bf16.msra.mxu0 0
  %829 = vmatprep.subr.bf16.mxu0 0
  %830 = vmatpush1.bf16.msra.mxu0 0
  %831 = vmatprep.mubr.bf16.mxu0 0
  %832 = vmatmul.mubr.bf16.gmra.mrb[0].mxu0 %v645
  %v833 = vpop.f32.mrb[0].mxu0
  %v834 = vadd.f32 %v786, %v833
  %v835 = vpop.f32.mrb[0].mxu0
  %v836 = vpop.f32.mrb[0].mxu0
  %v837 = vadd.f32 %v786, %v836
  %v838 = vpop.f32.mrb[0].mxu0
  %839 = vmatprep.mubr.bf16.mxu0 0
  %840 = vmatmul.mubr.bf16.gmra.mrb[0].mxu0 %v648
  %v841 = vpop.f32.mrb[0].mxu0
  %v842 = vadd.f32 %v786, %v841
  %v843 = vpop.f32.mrb[0].mxu0
  %v844 = vpop.f32.mrb[0].mxu0
  %v845 = vadd.f32 %v786, %v844
  %v846 = vpop.f32.mrb[0].mxu0
  %847 = vmatprep.mubr.bf16.mxu0 0
  %848 = vmatmul.mubr.bf16.gmra.mrb[0].mxu0 %v651
  %v849 = vpop.f32.mrb[0].mxu0
  %v850 = vadd.f32 %v786, %v849
  %v851 = vpop.f32.mrb[0].mxu0
  %v852 = vpop.f32.mrb[0].mxu0
  %v853 = vadd.f32 %v786, %v852
  %v854 = vpop.f32.mrb[0].mxu0
  %855 = vmatprep.mubr.bf16.mxu0 0
  %856 = vmatmul.mubr.bf16.gmra.mrb[0].mxu0 %v654
  %v857 = vpop.f32.mrb[0].mxu0
  %v858 = vadd.f32 %v786, %v857
  %v859 = vpop.f32.mrb[0].mxu0
  %v860 = vpop.f32.mrb[0].mxu0
  %v861 = vadd.f32 %v786, %v860
  %v862 = vpop.f32.mrb[0].mxu0
  %863 = vdwg.mxu0
  %864 = vset.pattern.permute.xlu0 1
  %865 = vperm.xlu0 %864, %v604
  %v866 = vpop.permute.xlu0 %865
  %868 = vset.pattern.permute.xlu0 1
  %869 = vperm.xlu0 %868, %v606
  %v870 = vpop.permute.xlu0 %869
  %872 = vset.pattern.permute.xlu0 1
  %873 = vperm.xlu0 %872, %v608
  %v874 = vpop.permute.xlu0 %873
  %876 = vset.pattern.permute.xlu0 1
  %877 = vperm.xlu0 %876, %v610
  %v878 = vpop.permute.xlu0 %877
  %880 = vset.pattern.permute.xlu0 1
  %881 = vperm.xlu0 %880, %v612
  %v882 = vpop.permute.xlu0 %881
  %884 = vset.pattern.permute.xlu0 1
  %885 = vperm.xlu0 %884, %v614
  %v886 = vpop.permute.xlu0 %885
  %888 = vset.pattern.permute.xlu0 1
  %889 = vperm.xlu0 %888, %v616
  %v890 = vpop.permute.xlu0 %889
  %892 = vset.pattern.permute.xlu0 1
  %893 = vperm.xlu0 %892, %v618
  %v894 = vpop.permute.xlu0 %893
  %v896 = vmul.f32 %v866, %v834
  %v897 = vmul.f32 %v870, %v837
  %v898 = vmul.f32 %v874, %v842
  %v899 = vmul.f32 %v878, %v845
  %v900 = vmul.f32 %v882, %v850
  %v901 = vmul.f32 %v886, %v853
  %v902 = vmul.f32 %v890, %v858
  %v903 = vmul.f32 %v894, %v861
  %v904 = vadd.f32 %v769, %v896
  %v905 = vadd.f32 %v770, %v897
  %v906 = vadd.f32 %v771, %v898
  %v907 = vadd.f32 %v772, %v899
  %v908 = vadd.f32 %v773, %v900
  %v909 = vadd.f32 %v774, %v901
  %v910 = vadd.f32 %v775, %v902
  %v911 = vadd.f32 %v776, %v903
  %s912 = scalar_lea.vmem %s2, 32
  %v913 = vld [vmem:[%s912] sm:$0xf]
  %v914 = vld [vmem:[%s912 + $0x4] sm:$0xf]
  %v915 = vld [vmem:[%s912 + $0x8] sm:$0xf]
  %v916 = vld [vmem:[%s912 + $0xc] sm:$0xf]
  %v917 = vld [vmem:[%s3 + $0x2] sm:$0x1]
  %v918 = vlaneseq
  %v919 = vshrl.u32 %v918, 7
  %v920 = vsub.s32 0, %v919
  %v921 = vrot.slane %v917, %v920
  %v926 = vunpack.c.l.b16 %v913
  %v927 = vunpack.c.l.b16 %v914
  %v928 = vunpack.c.l.b16 %v915
  %v929 = vunpack.c.l.b16 %v916
  %v930 = vpack.c.b16 %v927, %v926
  %v931 = vpack.c.b16 %v929, %v928
  %934 = vmatprep.subr.bf16.mxu0 0
  %935 = vmatpush1.bf16.msra.mxu0 %v930
  %936 = vmatprep.subr.bf16.mxu0 0
  %937 = vmatpush1.bf16.msra.mxu0 %v931
  %938 = vmatprep.subr.bf16.mxu0 0
  %939 = vmatpush1.bf16.msra.mxu0 0
  %940 = vmatprep.subr.bf16.mxu0 0
  %941 = vmatpush1.bf16.msra.mxu0 0
  %942 = vmatprep.subr.bf16.mxu0 0
  %943 = vmatpush1.bf16.msra.mxu0 0
  %944 = vmatprep.subr.bf16.mxu0 0
  %945 = vmatpush1.bf16.msra.mxu0 0
  %946 = vmatprep.subr.bf16.mxu0 0
  %947 = vmatpush1.bf16.msra.mxu0 0
  %948 = vmatprep.subr.bf16.mxu0 0
  %949 = vmatpush1.bf16.msra.mxu0 0
  %950 = vmatprep.subr.bf16.mxu0 0
  %951 = vmatpush1.bf16.msra.mxu0 0
  %952 = vmatprep.subr.bf16.mxu0 0
  %953 = vmatpush1.bf16.msra.mxu0 0
  %954 = vmatprep.subr.bf16.mxu0 0
  %955 = vmatpush1.bf16.msra.mxu0 0
  %956 = vmatprep.subr.bf16.mxu0 0
  %957 = vmatpush1.bf16.msra.mxu0 0
  %958 = vmatprep.subr.bf16.mxu0 0
  %959 = vmatpush1.bf16.msra.mxu0 0
  %960 = vmatprep.subr.bf16.mxu0 0
  %961 = vmatpush1.bf16.msra.mxu0 0
  %962 = vmatprep.subr.bf16.mxu0 0
  %963 = vmatpush1.bf16.msra.mxu0 0
  %964 = vmatprep.subr.bf16.mxu0 0
  %965 = vmatpush1.bf16.msra.mxu0 0
  %966 = vmatprep.mubr.bf16.mxu0 0
  %967 = vmatmul.mubr.bf16.gmra.mrb[0].mxu0 %v645
  %v968 = vpop.f32.mrb[0].mxu0
  %v969 = vadd.f32 %v921, %v968
  %v970 = vpop.f32.mrb[0].mxu0
  %v971 = vpop.f32.mrb[0].mxu0
  %v972 = vadd.f32 %v921, %v971
  %v973 = vpop.f32.mrb[0].mxu0
  %974 = vmatprep.mubr.bf16.mxu0 0
  %975 = vmatmul.mubr.bf16.gmra.mrb[0].mxu0 %v648
  %v976 = vpop.f32.mrb[0].mxu0
  %v977 = vadd.f32 %v921, %v976
  %v978 = vpop.f32.mrb[0].mxu0
  %v979 = vpop.f32.mrb[0].mxu0
  %v980 = vadd.f32 %v921, %v979
  %v981 = vpop.f32.mrb[0].mxu0
  %982 = vmatprep.mubr.bf16.mxu0 0
  %983 = vmatmul.mubr.bf16.gmra.mrb[0].mxu0 %v651
  %v984 = vpop.f32.mrb[0].mxu0
  %v985 = vadd.f32 %v921, %v984
  %v986 = vpop.f32.mrb[0].mxu0
  %v987 = vpop.f32.mrb[0].mxu0
  %v988 = vadd.f32 %v921, %v987
  %v989 = vpop.f32.mrb[0].mxu0
  %990 = vmatprep.mubr.bf16.mxu0 0
  %991 = vmatmul.mubr.bf16.gmra.mrb[0].mxu0 %v654
  %v992 = vpop.f32.mrb[0].mxu0
  %v993 = vadd.f32 %v921, %v992
  %v994 = vpop.f32.mrb[0].mxu0
  %v995 = vpop.f32.mrb[0].mxu0
  %v996 = vadd.f32 %v921, %v995
  %v997 = vpop.f32.mrb[0].mxu0
  %998 = vdwg.mxu0
  %999 = vset.pattern.permute.xlu0 2
  %1000 = vperm.xlu0 %999, %v604
  %v1001 = vpop.permute.xlu0 %1000
  %1003 = vset.pattern.permute.xlu0 2
  %1004 = vperm.xlu0 %1003, %v606
  %v1005 = vpop.permute.xlu0 %1004
  %1007 = vset.pattern.permute.xlu0 2
  %1008 = vperm.xlu0 %1007, %v608
  %v1009 = vpop.permute.xlu0 %1008
  %1011 = vset.pattern.permute.xlu0 2
  %1012 = vperm.xlu0 %1011, %v610
  %v1013 = vpop.permute.xlu0 %1012
  %1015 = vset.pattern.permute.xlu0 2
  %1016 = vperm.xlu0 %1015, %v612
  %v1017 = vpop.permute.xlu0 %1016
  %1019 = vset.pattern.permute.xlu0 2
  %1020 = vperm.xlu0 %1019, %v614
  %v1021 = vpop.permute.xlu0 %1020
  %1023 = vset.pattern.permute.xlu0 2
  %1024 = vperm.xlu0 %1023, %v616
  %v1025 = vpop.permute.xlu0 %1024
  %1027 = vset.pattern.permute.xlu0 2
  %1028 = vperm.xlu0 %1027, %v618
  %v1029 = vpop.permute.xlu0 %1028
  %v1031 = vmul.f32 %v1001, %v969
  %v1032 = vmul.f32 %v1005, %v972
  %v1033 = vmul.f32 %v1009, %v977
  %v1034 = vmul.f32 %v1013, %v980
  %v1035 = vmul.f32 %v1017, %v985
  %v1036 = vmul.f32 %v1021, %v988
  %v1037 = vmul.f32 %v1025, %v993
  %v1038 = vmul.f32 %v1029, %v996
  %v1039 = vadd.f32 %v904, %v1031
  %v1040 = vadd.f32 %v905, %v1032
  %v1041 = vadd.f32 %v906, %v1033
  %v1042 = vadd.f32 %v907, %v1034
  %v1043 = vadd.f32 %v908, %v1035
  %v1044 = vadd.f32 %v909, %v1036
  %v1045 = vadd.f32 %v910, %v1037
  %v1046 = vadd.f32 %v911, %v1038
  %s1047 = scalar_lea.vmem %s2, 48
  %v1048 = vld [vmem:[%s1047] sm:$0xf]
  %v1049 = vld [vmem:[%s1047 + $0x4] sm:$0xf]
  %v1050 = vld [vmem:[%s1047 + $0x8] sm:$0xf]
  %v1051 = vld [vmem:[%s1047 + $0xc] sm:$0xf]
  %v1052 = vld [vmem:[%s3 + $0x3] sm:$0x1]
  %v1053 = vlaneseq
  %v1054 = vshrl.u32 %v1053, 7
  %v1055 = vsub.s32 0, %v1054
  %v1056 = vrot.slane %v1052, %v1055
  %v1061 = vunpack.c.l.b16 %v1048
  %v1062 = vunpack.c.l.b16 %v1049
  %v1063 = vunpack.c.l.b16 %v1050
  %v1064 = vunpack.c.l.b16 %v1051
  %v1065 = vpack.c.b16 %v1062, %v1061
  %v1066 = vpack.c.b16 %v1064, %v1063
  %1069 = vmatprep.subr.bf16.mxu0 0
  %1070 = vmatpush1.bf16.msra.mxu0 %v1065
  %1071 = vmatprep.subr.bf16.mxu0 0
  %1072 = vmatpush1.bf16.msra.mxu0 %v1066
  %1073 = vmatprep.subr.bf16.mxu0 0
  %1074 = vmatpush1.bf16.msra.mxu0 0
  %1075 = vmatprep.subr.bf16.mxu0 0
  %1076 = vmatpush1.bf16.msra.mxu0 0
  %1077 = vmatprep.subr.bf16.mxu0 0
  %1078 = vmatpush1.bf16.msra.mxu0 0
  %1079 = vmatprep.subr.bf16.mxu0 0
  %1080 = vmatpush1.bf16.msra.mxu0 0
  %1081 = vmatprep.subr.bf16.mxu0 0
  %1082 = vmatpush1.bf16.msra.mxu0 0
  %1083 = vmatprep.subr.bf16.mxu0 0
  %1084 = vmatpush1.bf16.msra.mxu0 0
  %1085 = vmatprep.subr.bf16.mxu0 0
  %1086 = vmatpush1.bf16.msra.mxu0 0
  %1087 = vmatprep.subr.bf16.mxu0 0
  %1088 = vmatpush1.bf16.msra.mxu0 0
  %1089 = vmatprep.subr.bf16.mxu0 0
  %1090 = vmatpush1.bf16.msra.mxu0 0
  %1091 = vmatprep.subr.bf16.mxu0 0
  %1092 = vmatpush1.bf16.msra.mxu0 0
  %1093 = vmatprep.subr.bf16.mxu0 0
  %1094 = vmatpush1.bf16.msra.mxu0 0
  %1095 = vmatprep.subr.bf16.mxu0 0
  %1096 = vmatpush1.bf16.msra.mxu0 0
  %1097 = vmatprep.subr.bf16.mxu0 0
  %1098 = vmatpush1.bf16.msra.mxu0 0
  %1099 = vmatprep.subr.bf16.mxu0 0
  %1100 = vmatpush1.bf16.msra.mxu0 0
  %1101 = vmatprep.mubr.bf16.mxu0 0
  %1102 = vmatmul.mubr.bf16.gmra.mrb[0].mxu0 %v645
  %v1103 = vpop.f32.mrb[0].mxu0
  %v1104 = vadd.f32 %v1056, %v1103
  %v1105 = vpop.f32.mrb[0].mxu0
  %v1106 = vpop.f32.mrb[0].mxu0
  %v1107 = vadd.f32 %v1056, %v1106
  %v1108 = vpop.f32.mrb[0].mxu0
  %1109 = vmatprep.mubr.bf16.mxu0 0
  %1110 = vmatmul.mubr.bf16.gmra.mrb[0].mxu0 %v648
  %v1111 = vpop.f32.mrb[0].mxu0
  %v1112 = vadd.f32 %v1056, %v1111
  %v1113 = vpop.f32.mrb[0].mxu0
  %v1114 = vpop.f32.mrb[0].mxu0
  %v1115 = vadd.f32 %v1056, %v1114
  %v1116 = vpop.f32.mrb[0].mxu0
  %1117 = vmatprep.mubr.bf16.mxu0 0
  %1118 = vmatmul.mubr.bf16.gmra.mrb[0].mxu0 %v651
  %v1119 = vpop.f32.mrb[0].mxu0
  %v1120 = vadd.f32 %v1056, %v1119
  %v1121 = vpop.f32.mrb[0].mxu0
  %v1122 = vpop.f32.mrb[0].mxu0
  %v1123 = vadd.f32 %v1056, %v1122
  %v1124 = vpop.f32.mrb[0].mxu0
  %1125 = vmatprep.mubr.bf16.mxu0 0
  %1126 = vmatmul.mubr.bf16.gmra.mrb[0].mxu0 %v654
  %v1127 = vpop.f32.mrb[0].mxu0
  %v1128 = vadd.f32 %v1056, %v1127
  %v1129 = vpop.f32.mrb[0].mxu0
  %v1130 = vpop.f32.mrb[0].mxu0
  %v1131 = vadd.f32 %v1056, %v1130
  %v1132 = vpop.f32.mrb[0].mxu0
  %1133 = vdwg.mxu0
  %1134 = vset.pattern.permute.xlu0 3
  %1135 = vperm.xlu0 %1134, %v604
  %v1136 = vpop.permute.xlu0 %1135
  %1138 = vset.pattern.permute.xlu0 3
  %1139 = vperm.xlu0 %1138, %v606
  %v1140 = vpop.permute.xlu0 %1139
  %1142 = vset.pattern.permute.xlu0 3
  %1143 = vperm.xlu0 %1142, %v608
  %v1144 = vpop.permute.xlu0 %1143
  %1146 = vset.pattern.permute.xlu0 3
  %1147 = vperm.xlu0 %1146, %v610
  %v1148 = vpop.permute.xlu0 %1147
  %1150 = vset.pattern.permute.xlu0 3
  %1151 = vperm.xlu0 %1150, %v612
  %v1152 = vpop.permute.xlu0 %1151
  %1154 = vset.pattern.permute.xlu0 3
  %1155 = vperm.xlu0 %1154, %v614
  %v1156 = vpop.permute.xlu0 %1155
  %1158 = vset.pattern.permute.xlu0 3
  %1159 = vperm.xlu0 %1158, %v616
  %v1160 = vpop.permute.xlu0 %1159
  %1162 = vset.pattern.permute.xlu0 3
  %1163 = vperm.xlu0 %1162, %v618
  %v1164 = vpop.permute.xlu0 %1163
  %v1166 = vmul.f32 %v1136, %v1104
  %v1167 = vmul.f32 %v1140, %v1107
  %v1168 = vmul.f32 %v1144, %v1112
  %v1169 = vmul.f32 %v1148, %v1115
  %v1170 = vmul.f32 %v1152, %v1120
  %v1171 = vmul.f32 %v1156, %v1123
  %v1172 = vmul.f32 %v1160, %v1128
  %v1173 = vmul.f32 %v1164, %v1131
  %v1174 = vadd.f32 %v1039, %v1166
  %v1175 = vadd.f32 %v1040, %v1167
  %v1176 = vadd.f32 %v1041, %v1168
  %v1177 = vadd.f32 %v1042, %v1169
  %v1178 = vadd.f32 %v1043, %v1170
  %v1179 = vadd.f32 %v1044, %v1171
  %v1180 = vadd.f32 %v1045, %v1172
  %v1181 = vadd.f32 %v1046, %v1173
  %1182 = vst.msk [vmem:[%s4] sm:$0xff] %vm30, %v1174
  %1183 = vst.msk [vmem:[%s4 + $0x8] sm:$0xff] %vm30, %v1175
  %1184 = vst.msk [vmem:[%s4 + $0x10] sm:$0xff] %vm30, %v1176
  %1185 = vst.msk [vmem:[%s4 + $0x18] sm:$0xff] %vm30, %v1177
  %1186 = vst.msk [vmem:[%s4 + $0x20] sm:$0xff] %vm30, %v1178
  %1187 = vst.msk [vmem:[%s4 + $0x28] sm:$0xff] %vm30, %v1179
  %1188 = vst.msk [vmem:[%s4 + $0x30] sm:$0xff] %vm30, %v1180
  %1189 = vst.msk [vmem:[%s4 + $0x38] sm:$0xff] %vm30, %v1181
  // Predicated region
  $region18: #{tpu_custom_call.1} parent=0 // pred_check
    _
  $region19: #{tpu_custom_call.1} parent=0 // pred_check_branch
    %1191 = sbr.rel (0) target = $region21
  $region20: #{tpu_custom_call.1} parent=0 // pred_region
    _
  $region21: #{tpu_custom_call.1} parent=0 // pred_fallthru
    _
  // Predicated region
  $region22: #{tpu_custom_call.1} parent=0 // pred_check
    _
  $region23: #{tpu_custom_call.1} parent=0 // pred_check_branch
    %1193 = sbr.rel (0) target = $region25
  $region24: #{tpu_custom_call.1} parent=0 // pred_region
    _
  $region25: #{tpu_custom_call.1} parent=0 // pred_fallthru
    _

</llo_original>
